<compile_context>
chip_gen: v7x
topology: tpu7x:2x2x1
jax: 0.10.0
libtpu: 0.0.40
codegen_flags: <defaults>
</compile_context>

<pallas_src>
import math
import functools

import jax
import jax.numpy as jnp
from jax import lax
from jax.experimental import pallas as pl
from jax.experimental.pallas import tpu as pltpu


def cluster_loss_kernel(cc_blk_ref, cc_ref, out_ref, inv_row_ref, acc_ref, *,
                        class_num, n_valid, temperature, block_rows):
    """One row block of the contrastive-CE stage; last step adds the cheap O(B*N) terms.

    cc_blk_ref : (B_pad, TR)    f32  columns [r*TR, (r+1)*TR) of cc (streamed per grid step)
    cc_ref     : (B_pad, N_pad) f32  full cc (cols 0..K-1 = c_i, K..N-1 = c_j, rest zero pad)
    out_ref    : (1, 1) f32 SMEM     scalar loss
    inv_row_ref: (1, N_pad) f32 VMEM scratch -- per-column inverse norms (computed at step 0)
    acc_ref    : (1, 1) f32 VMEM     scratch -- running sum of row-wise logsumexp
    """
    K = class_num
    N = n_valid
    TR = block_rows
    NP = cc_ref.shape[1]
    inv_t = 1.0 / temperature
    r = pl.program_id(0)

    cc = cc_ref[...]                                              # (B_pad, NP)
    lane = lax.broadcasted_iota(jnp.int32, (1, NP), 1)            # (1, NP) column ids

    # ---- step 0: zero the accumulator + per-column inverse norms (2N rsqrt total, on the EUP) --
    @pl.when(r == 0)
    def _():
        acc_ref[...] = jnp.zeros_like(acc_ref)
        sq = jnp.sum(cc * cc, axis=0, keepdims=True)              # (1, NP) squared column norms
        # max(||a||*||b||, 1e-8) == sqrt(max(a,1e-16))*sqrt(max(b,1e-16)) whenever both norms are
        # >= 1e-8 -- always true for softmax cluster assignments (documented assumption).
        inv_row_ref[...] = lax.rsqrt(jnp.maximum(sq, 1e-16))

    inv_row = inv_row_ref[...]                                    # (1, NP)

    # ---- per-step row block of the cosine-similarity matrix ----
    blk = cc_blk_ref[...]                                         # (B_pad, TR)
    sq_blk = jnp.sum(blk * blk, axis=0, keepdims=True)            # (1, TR)
    # fold this block's inverse norms and 1/temperature into the matmul LHS (O(B*TR) VPU work)
    blk_n = blk * (lax.rsqrt(jnp.maximum(sq_blk, 1e-16)) * inv_t)
    # transposed-LHS Gram block on the MXU (no materialized transpose)
    dots = lax.dot_general(blk_n, cc, (((0,), (0,)), ((), ())),
                           preferred_element_type=jnp.float32)    # (TR, NP)
    sim = dots * inv_row                                          # cosine similarity / T

    row_g = lax.broadcasted_iota(jnp.int32, (TR, 1), 0) + r * TR  # (TR, 1) global row ids
    # logits of row i = every column except the self-diagonal; padded columns excluded too.
    sim_nd = jnp.where((lane == row_g) | (lane >= N), jnp.float32(-1e30), sim)
    m = jnp.max(sim_nd, axis=1, keepdims=True)                    # (TR, 1)
    lse = m + jnp.log(jnp.sum(jnp.exp(sim_nd - m), axis=1, keepdims=True))
    acc_ref[...] += jnp.sum(jnp.where(row_g < N, lse, 0.0), axis=0, keepdims=True)

    # ---- last step: entropy regularizer + positive logits (O(B*N)) + final scalar ----
    @pl.when(r == pl.num_programs(0) - 1)
    def _():
        col_sums = jnp.sum(cc, axis=0, keepdims=True)             # (1, NP)
        is_i = lane < K
        is_j = (lane >= K) & (lane < N)
        sum_i = jnp.sum(jnp.where(is_i, col_sums, 0.0), axis=1, keepdims=True)   # (1, 1)
        sum_j = jnp.sum(jnp.where(is_j, col_sums, 0.0), axis=1, keepdims=True)   # (1, 1)
        p = col_sums / jnp.where(is_i, sum_i, sum_j)
        # p*log(p) is NaN if a real cluster column sums to exactly 0 -- parity with the reference;
        # padded columns are masked out here.
        ne = (jnp.sum(jnp.where(is_i | is_j, p * jnp.log(p), 0.0), axis=1, keepdims=True)
              + 2.0 * math.log(K))                                # (1, 1)

        # positives: sim[k, K+k] == sim[K+k, k] (Gram symmetry) -> 2 * O(B*K) dot products.
        pos_dot = jnp.sum(cc[:, :K] * cc[:, K:N], axis=0, keepdims=True)          # (1, K)
        pos_sum = 2.0 * inv_t * jnp.sum(pos_dot * inv_row[:, :K] * inv_row[:, K:N],
                                        axis=1, keepdims=True)    # (1, 1)

        total = (acc_ref[...] - pos_sum) * (1.0 / N) + ne         # CrossEntropy(sum)/N + ne_loss
        out_ref[0, 0] = total[0, 0]


@functools.partial(jax.jit, static_argnums=(2, 3))
def cluster_loss(c_i, c_j, class_num, temperature):
    K = class_num
    N = 2 * K
    # Host glue: one class-axis concat; sublane-pad batch to 8, lane-pad classes to 128.
    cc = jnp.concatenate([c_i.astype(jnp.float32), c_j.astype(jnp.float32)], axis=1)  # (B, N)
    B = cc.shape[0]
    B_pad = ((B + 7) // 8) * 8
    N_pad = ((N + 127) // 128) * 128
    if B_pad != B or N_pad != N:
        cc = jnp.pad(cc, ((0, B_pad - B), (0, N_pad - N)))   # zero rows/cols masked in-kernel

    # Row-block size: largest of {512, 256, 128} dividing N_pad whose ~4 live (TR, N_pad) f32
    # temporaries stay well inside the scoped-VMEM budget (early cliff on v5e's 16 MiB default).
    TR = 128
    for cand in (512, 256, 128):
        if N_pad % cand == 0 and 4 * cand * N_pad * 4 <= 24 * 1024 * 1024:
            TR = cand
            break
    grid = (N_pad // TR,)

    # Scoped-VMEM budget: resident cc + double-buffered column block + scratch + ~6 (TR, N_pad)
    # temporaries; clamp to [32 MiB, 64 MiB] (v7x physical VMEM is 64 MiB).
    need = 4 * (2 * B_pad * N_pad + 2 * B_pad * TR + N_pad + 8 + 6 * TR * N_pad) + (2 << 20)
    vmem_limit = int(min(max(need, 32 * 1024 * 1024), 64 * 1024 * 1024))

    kernel = functools.partial(
        cluster_loss_kernel,
        class_num=K, n_valid=N, temperature=temperature, block_rows=TR,
    )
    out = pl.pallas_call(
        kernel,
        out_shape=jax.ShapeDtypeStruct((1, 1), jnp.float32),
        grid_spec=pltpu.PrefetchScalarGridSpec(
            num_scalar_prefetch=0,
            grid=grid,
            in_specs=[
                pl.BlockSpec((B_pad, TR), lambda r: (0, r)),      # streamed row-block columns
                pl.BlockSpec((B_pad, N_pad), lambda r: (0, 0)),   # full cc, resident (revisited)
            ],
            out_specs=pl.BlockSpec(memory_space=pltpu.MemorySpace.SMEM),
            scratch_shapes=[
                pltpu.VMEM((1, N_pad), jnp.float32),              # per-column inverse norms
                pltpu.VMEM((1, 1), jnp.float32),                  # running sum(lse)
            ],
        ),
        compiler_params=pltpu.CompilerParams(
            dimension_semantics=("arbitrary",),                   # reduction into shared scalar
            vmem_limit_bytes=vmem_limit,
        ),
    )(cc, cc)
    return out[0, 0]


def cluster_loss_ref(c_i, c_j, class_num, temperature):
    """Pure-JAX reference mirroring the PyTorch forward exactly."""
    p_i = c_i.sum(0)
    p_i = p_i / p_i.sum()
    ne_i = math.log(p_i.shape[0]) + (p_i * jnp.log(p_i)).sum()
    p_j = c_j.sum(0)
    p_j = p_j / p_j.sum()
    ne_j = math.log(p_j.shape[0]) + (p_j * jnp.log(p_j)).sum()
    ne_loss = ne_i + ne_j

    N = 2 * class_num
    c = jnp.concatenate([c_i.T, c_j.T], axis=0)               # (N, B)
    num = c @ c.T
    nrm = jnp.linalg.norm(c, axis=1)
    sim = num / jnp.maximum(nrm[:, None] * nrm[None, :], 1e-8) / temperature

    sim_i_j = jnp.diagonal(sim, offset=class_num)
    sim_j_i = jnp.diagonal(sim, offset=-class_num)
    positives = jnp.concatenate([sim_i_j, sim_j_i]).reshape(N, 1)

    mask = jnp.ones((N, N), bool)
    mask = mask.at[jnp.arange(N), jnp.arange(N)].set(False)
    idx = jnp.arange(class_num)
    mask = mask.at[idx, class_num + idx].set(False)
    mask = mask.at[class_num + idx, idx].set(False)
    negatives = sim[mask].reshape(N, -1)

    logits = jnp.concatenate([positives, negatives], axis=1)   # (N, N-1)
    lse = jax.scipy.special.logsumexp(logits, axis=1)
    loss = jnp.sum(lse - logits[:, 0]) / N                     # CE(sum) / N, label 0
    return loss + ne_loss


if __name__ == "__main__":
    class_num = 8
    batch = 16
    temperature = 0.5

    key = jax.random.PRNGKey(0)
    k1, k2 = jax.random.split(key)
    # soft cluster-assignment probabilities (rows sum to 1), like softmax head outputs
    c_i = jax.nn.softmax(jax.random.normal(k1, (batch, class_num), jnp.float32), axis=1)
    c_j = jax.nn.softmax(jax.random.normal(k2, (batch, class_num), jnp.float32), axis=1)

    loss = cluster_loss(c_i, c_j, class_num, temperature)
    jax.block_until_ready(loss)

    ref = cluster_loss_ref(c_i, c_j, class_num, temperature)
    assert abs(float(loss) - float(ref)) < 1e-4, (float(loss), float(ref))
    print("KERNEL_OK")
</pallas_src>

<mosaic_0001>
module attributes {stable_mosaic.version = 11 : i64} {
  func.func @cluster_loss_kernel(%arg0: i32, %arg1: memref<16x128xf32, #tpu.memory_space<vmem>>, %arg2: memref<16x128xf32, #tpu.memory_space<vmem>>, %arg3: memref<1x1xf32, #tpu.memory_space<smem>>, %arg4: memref<1x128xf32, #tpu.memory_space<vmem>>, %arg5: memref<1x1xf32, #tpu.memory_space<vmem>>) attributes {dimension_semantics = [#tpu.dimension_semantics<arbitrary>], iteration_bounds = array<i64: 1>, scalar_prefetch = 0 : i64, scratch_operands = 2 : i64, tpu.core_type = #tpu.core_type<tc>, window_params = [{transform_indices = @transform_0, window_bounds = array<i64: 16, 128>}, {pipeline_mode = #tpu.pipeline_mode<synchronous>, transform_indices = @transform_1, window_bounds = array<i64: 16, 128>}, {transform_indices = @transform_2, window_bounds = array<i64: 1, 1>}]} {
    %c0 = arith.constant 0 : index
    %c0_0 = arith.constant 0 : index
    %0 = vector.load %arg2[%c0, %c0_0] : memref<16x128xf32, #tpu.memory_space<vmem>>, vector<16x128xf32>
    %1 = tpu.iota {dimensions = array<i32: 1>} : vector<1x128xi32>
    %c0_i32 = arith.constant 0 : i32
    %2 = arith.cmpi eq, %arg0, %c0_i32 : i32
    %3 = arith.extui %2 : i1 to i32
    %c0_i32_1 = arith.constant 0 : i32
    %4 = arith.cmpi ne, %3, %c0_i32_1 : i32
    scf.if %4 {
      %cst_21 = arith.constant 0.000000e+00 : f32
      %54 = vector.broadcast %cst_21 : f32 to vector<1x1xf32>
      %c0_22 = arith.constant 0 : index
      %c0_23 = arith.constant 0 : index
      %55 = vector.load %arg5[%c0_22, %c0_23] : memref<1x1xf32, #tpu.memory_space<vmem>>, vector<1x1xf32>
      tpu.vector_store %arg5[%c0_22, %c0_23], %54 {strides = array<i32>} : memref<1x1xf32, #tpu.memory_space<vmem>>, vector<1x1xf32>,
      %56 = arith.mulf %0, %0 : vector<16x128xf32>
      %cst_24 = arith.constant dense<0.000000e+00> : vector<128xf32>
      %57 = vector.multi_reduction <add>, %56, %cst_24 [0] : vector<16x128xf32> to vector<128xf32>
      %58 = vector.shape_cast %57 : vector<128xf32> to vector<1x128xf32>
      %cst_25 = arith.constant 1.000000e-16 : f32
      %59 = vector.broadcast %cst_25 : f32 to vector<1x128xf32>
      %60 = arith.maximumf %58, %59 : vector<1x128xf32>
      %61 = math.rsqrt %60 : vector<1x128xf32>
      %c0_26 = arith.constant 0 : index
      %c0_27 = arith.constant 0 : index
      %62 = vector.load %arg4[%c0_26, %c0_27] : memref<1x128xf32, #tpu.memory_space<vmem>>, vector<1x128xf32>
      tpu.vector_store %arg4[%c0_26, %c0_27], %61 {strides = array<i32>} : memref<1x128xf32, #tpu.memory_space<vmem>>, vector<1x128xf32>,
    } else {
    }
    %c0_2 = arith.constant 0 : index
    %c0_3 = arith.constant 0 : index
    %5 = vector.load %arg4[%c0_2, %c0_3] : memref<1x128xf32, #tpu.memory_space<vmem>>, vector<1x128xf32>
    %c0_4 = arith.constant 0 : index
    %c0_5 = arith.constant 0 : index
    %6 = vector.load %arg1[%c0_4, %c0_5] : memref<16x128xf32, #tpu.memory_space<vmem>>, vector<16x128xf32>
    %7 = arith.mulf %6, %6 : vector<16x128xf32>
    %cst = arith.constant dense<0.000000e+00> : vector<128xf32>
    %8 = vector.multi_reduction <add>, %7, %cst [0] : vector<16x128xf32> to vector<128xf32>
    %9 = vector.shape_cast %8 : vector<128xf32> to vector<1x128xf32>
    %cst_6 = arith.constant 1.000000e-16 : f32
    %10 = vector.broadcast %cst_6 : f32 to vector<1x128xf32>
    %11 = arith.maximumf %9, %10 : vector<1x128xf32>
    %12 = math.rsqrt %11 : vector<1x128xf32>
    %cst_7 = arith.constant 2.000000e+00 : f32
    %13 = vector.broadcast %cst_7 : f32 to vector<1x128xf32>
    %14 = arith.mulf %12, %13 : vector<1x128xf32>
    %15 = vector.broadcast %14 : vector<1x128xf32> to vector<16x128xf32>
    %16 = arith.mulf %6, %15 : vector<16x128xf32>
    %cst_8 = arith.constant dense<0.000000e+00> : vector<128x128xf32>
    %17 = tpu.matmul %16, %0, %cst_8 {dimension_numbers = #tpu.dot_dimension_numbers<[0], [0], [1], [1], [0, 1, 1, 1], [], []>} : vector<16x128xf32>, vector<16x128xf32>, vector<128x128xf32> -> vector<128x128xf32>
    %18 = vector.broadcast %5 : vector<1x128xf32> to vector<128x128xf32>
    %19 = arith.mulf %17, %18 : vector<128x128xf32>
    %20 = tpu.iota {dimensions = array<i32: 0>} : vector<128x1xi32>
    %c128_i32 = arith.constant 128 : i32
    %21 = arith.muli %arg0, %c128_i32 : i32
    %22 = vector.broadcast %21 : i32 to vector<128x1xi32>
    %23 = arith.addi %20, %22 : vector<128x1xi32>
    %24 = vector.broadcast %1 : vector<1x128xi32> to vector<128x128xi32>
    %25 = vector.broadcast %23 : vector<128x1xi32> to vector<128x128xi32>
    %26 = arith.cmpi eq, %24, %25 : vector<128x128xi32>
    %c16_i32 = arith.constant 16 : i32
    %27 = vector.broadcast %c16_i32 : i32 to vector<1x128xi32>
    %28 = arith.cmpi sge, %1, %27 : vector<1x128xi32>
    %29 = vector.broadcast %28 : vector<1x128xi1> to vector<128x128xi1>
    %30 = arith.ori %26, %29 : vector<128x128xi1>
    %cst_9 = arith.constant -1.000000e+30 : f32
    %31 = vector.broadcast %cst_9 : f32 to vector<128x128xf32>
    %32 = arith.select %30, %31, %19 : vector<128x128xi1>, vector<128x128xf32>
    %cst_10 = arith.constant dense<0xFF800000> : vector<128xf32>
    %33 = vector.multi_reduction <maximumf>, %32, %cst_10 [1] : vector<128x128xf32> to vector<128xf32>
    %34 = vector.shape_cast %33 : vector<128xf32> to vector<128x1xf32>
    %35 = vector.broadcast %34 : vector<128x1xf32> to vector<128x128xf32>
    %36 = arith.subf %32, %35 : vector<128x128xf32>
    %37 = math.exp %36 : vector<128x128xf32>
    %cst_11 = arith.constant dense<0.000000e+00> : vector<128xf32>
    %38 = vector.multi_reduction <add>, %37, %cst_11 [1] : vector<128x128xf32> to vector<128xf32>
    %39 = vector.shape_cast %38 : vector<128xf32> to vector<128x1xf32>
    %40 = math.log %39 : vector<128x1xf32>
    %41 = arith.addf %34, %40 : vector<128x1xf32>
    %c0_12 = arith.constant 0 : index
    %c0_13 = arith.constant 0 : index
    %42 = vector.load %arg5[%c0_12, %c0_13] : memref<1x1xf32, #tpu.memory_space<vmem>>, vector<1x1xf32>
    %c16_i32_14 = arith.constant 16 : i32
    %43 = vector.broadcast %c16_i32_14 : i32 to vector<128x1xi32>
    %44 = arith.cmpi slt, %23, %43 : vector<128x1xi32>
    %cst_15 = arith.constant 0.000000e+00 : f32
    %45 = vector.broadcast %cst_15 : f32 to vector<128x1xf32>
    %46 = arith.select %44, %41, %45 : vector<128x1xi1>, vector<128x1xf32>
    %cst_16 = arith.constant dense<0.000000e+00> : vector<1xf32>
    %47 = vector.multi_reduction <add>, %46, %cst_16 [0] : vector<128x1xf32> to vector<1xf32>
    %48 = vector.shape_cast %47 : vector<1xf32> to vector<1x1xf32>
    %49 = arith.addf %42, %48 : vector<1x1xf32>
    %c0_17 = arith.constant 0 : index
    %c0_18 = arith.constant 0 : index
    %50 = vector.load %arg5[%c0_17, %c0_18] : memref<1x1xf32, #tpu.memory_space<vmem>>, vector<1x1xf32>
    tpu.vector_store %arg5[%c0_17, %c0_18], %49 {strides = array<i32>} : memref<1x1xf32, #tpu.memory_space<vmem>>, vector<1x1xf32>,
    %c0_i32_19 = arith.constant 0 : i32
    %51 = arith.cmpi eq, %arg0, %c0_i32_19 : i32
    %52 = arith.extui %51 : i1 to i32
    %c0_i32_20 = arith.constant 0 : i32
    %53 = arith.cmpi ne, %52, %c0_i32_20 : i32
    scf.if %53 {
      %cst_21 = arith.constant dense<0.000000e+00> : vector<128xf32>
      %54 = vector.multi_reduction <add>, %0, %cst_21 [0] : vector<16x128xf32> to vector<128xf32>
      %55 = vector.shape_cast %54 : vector<128xf32> to vector<1x128xf32>
      %c8_i32 = arith.constant 8 : i32
      %56 = vector.broadcast %c8_i32 : i32 to vector<1x128xi32>
      %57 = arith.cmpi slt, %1, %56 : vector<1x128xi32>
      %c8_i32_22 = arith.constant 8 : i32
      %58 = vector.broadcast %c8_i32_22 : i32 to vector<1x128xi32>
      %59 = arith.cmpi sge, %1, %58 : vector<1x128xi32>
      %c16_i32_23 = arith.constant 16 : i32
      %60 = vector.broadcast %c16_i32_23 : i32 to vector<1x128xi32>
      %61 = arith.cmpi slt, %1, %60 : vector<1x128xi32>
      %62 = arith.andi %59, %61 : vector<1x128xi1>
      %cst_24 = arith.constant 0.000000e+00 : f32
      %63 = vector.broadcast %cst_24 : f32 to vector<1x128xf32>
      %64 = arith.select %57, %55, %63 : vector<1x128xi1>, vector<1x128xf32>
      %cst_25 = arith.constant dense<0.000000e+00> : vector<1xf32>
      %65 = vector.multi_reduction <add>, %64, %cst_25 [1] : vector<1x128xf32> to vector<1xf32>
      %66 = vector.shape_cast %65 : vector<1xf32> to vector<1x1xf32>
      %cst_26 = arith.constant 0.000000e+00 : f32
      %67 = vector.broadcast %cst_26 : f32 to vector<1x128xf32>
      %68 = arith.select %62, %55, %67 : vector<1x128xi1>, vector<1x128xf32>
      %cst_27 = arith.constant dense<0.000000e+00> : vector<1xf32>
      %69 = vector.multi_reduction <add>, %68, %cst_27 [1] : vector<1x128xf32> to vector<1xf32>
      %70 = vector.shape_cast %69 : vector<1xf32> to vector<1x1xf32>
      %71 = vector.shape_cast %66 : vector<1x1xf32> to vector<1x1xf32>
      %72 = vector.broadcast %71 : vector<1x1xf32> to vector<1x128xf32>
      %73 = vector.shape_cast %70 : vector<1x1xf32> to vector<1x1xf32>
      %74 = vector.broadcast %73 : vector<1x1xf32> to vector<1x128xf32>
      %75 = arith.select %57, %72, %74 : vector<1x128xi1>, vector<1x128xf32>
      %76 = arith.divf %55, %75 : vector<1x128xf32>
      %77 = arith.ori %57, %62 : vector<1x128xi1>
      %78 = math.log %76 : vector<1x128xf32>
      %79 = arith.mulf %76, %78 : vector<1x128xf32>
      %cst_28 = arith.constant 0.000000e+00 : f32
      %80 = vector.broadcast %cst_28 : f32 to vector<1x128xf32>
      %81 = arith.select %77, %79, %80 : vector<1x128xi1>, vector<1x128xf32>
      %cst_29 = arith.constant dense<0.000000e+00> : vector<1xf32>
      %82 = vector.multi_reduction <add>, %81, %cst_29 [1] : vector<1x128xf32> to vector<1xf32>
      %83 = vector.shape_cast %82 : vector<1xf32> to vector<1x1xf32>
      %cst_30 = arith.constant 4.15888309 : f32
      %84 = vector.broadcast %cst_30 : f32 to vector<1x1xf32>
      %85 = arith.addf %83, %84 : vector<1x1xf32>
      %86 = vector.extract_strided_slice %0 {offsets = [0, 0], sizes = [16, 8], strides = [1, 1]} : vector<16x128xf32> to vector<16x8xf32>
      %87 = vector.extract_strided_slice %0 {offsets = [0, 8], sizes = [16, 8], strides = [1, 1]} : vector<16x128xf32> to vector<16x8xf32>
      %88 = arith.mulf %86, %87 : vector<16x8xf32>
      %cst_31 = arith.constant dense<0.000000e+00> : vector<8xf32>
      %89 = vector.multi_reduction <add>, %88, %cst_31 [0] : vector<16x8xf32> to vector<8xf32>
      %90 = vector.shape_cast %89 : vector<8xf32> to vector<1x8xf32>
      %91 = vector.extract_strided_slice %5 {offsets = [0, 0], sizes = [1, 8], strides = [1, 1]} : vector<1x128xf32> to vector<1x8xf32>
      %92 = arith.mulf %90, %91 : vector<1x8xf32>
      %93 = vector.extract_strided_slice %5 {offsets = [0, 8], sizes = [1, 8], strides = [1, 1]} : vector<1x128xf32> to vector<1x8xf32>
      %94 = arith.mulf %92, %93 : vector<1x8xf32>
      %cst_32 = arith.constant dense<0.000000e+00> : vector<1xf32>
      %95 = vector.multi_reduction <add>, %94, %cst_32 [1] : vector<1x8xf32> to vector<1xf32>
      %96 = vector.shape_cast %95 : vector<1xf32> to vector<1x1xf32>
      %cst_33 = arith.constant 4.000000e+00 : f32
      %97 = vector.broadcast %cst_33 : f32 to vector<1x1xf32>
      %98 = arith.mulf %97, %96 : vector<1x1xf32>
      %c0_34 = arith.constant 0 : index
      %c0_35 = arith.constant 0 : index
      %99 = vector.load %arg5[%c0_34, %c0_35] : memref<1x1xf32, #tpu.memory_space<vmem>>, vector<1x1xf32>
      %100 = arith.subf %99, %98 : vector<1x1xf32>
      %cst_36 = arith.constant 6.250000e-02 : f32
      %101 = vector.broadcast %cst_36 : f32 to vector<1x1xf32>
      %102 = arith.mulf %100, %101 : vector<1x1xf32>
      %103 = arith.addf %102, %85 : vector<1x1xf32>
      %104 = vector.extract %103[0, 0] : f32 from vector<1x1xf32>
      %c0_37 = arith.constant 0 : index
      %c0_38 = arith.constant 0 : index
      %105 = memref.load %arg3[%c0_37, %c0_38] : memref<1x1xf32, #tpu.memory_space<smem>>
      memref.store %104, %arg3[%c0_37, %c0_38] : memref<1x1xf32, #tpu.memory_space<smem>>
    } else {
    }
    return
  }
  func.func @transform_0(%arg0: i32) -> (i32, i32) {
    %c0_i32 = arith.constant 0 : i32
    %c0_i32_0 = arith.constant 0 : i32
    return %c0_i32, %arg0 : i32, i32
  }
  func.func @transform_1(%arg0: i32) -> (i32, i32) {
    %c0_i32 = arith.constant 0 : i32
    %c0_i32_0 = arith.constant 0 : i32
    %c0_i32_1 = arith.constant 0 : i32
    return %c0_i32, %c0_i32_0 : i32, i32
  }
  func.func @transform_2(%arg0: i32) -> (i32, i32) {
    %c0_i32 = arith.constant 0 : i32
    %c0_i32_0 = arith.constant 0 : i32
    %c0_i32_1 = arith.constant 0 : i32
    return %c0_i32, %c0_i32_0 : i32, i32
  }
}

</mosaic_0001>

<llo_original>
// kernel: cluster_loss.1
$region0: #{cluster_loss.1}
  #allocation0 [shape = 'u32[]', space=smem, size = 0x4, offset = 0x4, fixed_abs, tag = 'smem constant byte address 0x4 - core index']
  #allocation1 [shape = 'u32[144,128]{1,0:T(1,128)}', space=vmem, size = 0x12000, scoped, tag = 'internal scratch']
  #allocation2 [shape = 'f32[1,128]{1,0:T(1,128)}', space=vmem, size = 0x200, scoped, tag = 'scratch operand']
  #allocation3 [shape = 'f32[1,1]{1,0:T(1,128)}', space=vmem, size = 0x200, scoped, tag = 'scratch operand']
  %s0 = inlined_call_operand.vmem [shape: f32[16,128], index: 0, kind: input, shape index: {}, may-alias: {0,1}]
  %s1 = inlined_call_operand.vmem [shape: f32[16,128], index: 1, kind: input, shape index: {}, may-alias: {0,1}]
  %s2 = inlined_call_operand.hbm [shape: f32[1,1], index: 2, kind: output, shape index: {}]
  %s3 = sld [smem:[#allocation0]]
  $region26: #{cluster_loss.1} parent=0
    _
  %s5 = ssub.s32 1, %s3
  %s6 = scalar_select 0, %s5, %s3
  $region1: #{cluster_loss.1} parent=0
    #allocation4 [shape = 'u8[512]{0}', space=smem, size = 0x200, scoped, tag = 'output window, operand 0, single buffered']
    #allocation5 [shape = 's32[1]{0}', space=sflag, size = 0x4, scoped, tag = 'scoped memory for cluster_loss.1']
    %7 = vsyncpa [#allocation5], 0
    // Predicated region
    $region2: #{cluster_loss.1} parent=1 // pred_check
      _
    $region3: #{cluster_loss.1} parent=1 // pred_check_branch
      %9 = sbr.rel (0) target = $region5
    $region4: #{cluster_loss.1} parent=1 // pred_region
      _
    $region5: #{cluster_loss.1} parent=1 // pred_fallthru
      _
    // Predicated region
    $region6: #{cluster_loss.1} parent=1 // pred_check
      _
    $region7: #{cluster_loss.1} parent=1 // pred_check_branch
      %11 = sbr.rel (0) target = $region9
    $region8: #{cluster_loss.1} parent=1 // pred_region
      _
    $region9: #{cluster_loss.1} parent=1 // pred_fallthru
      _
    %v12 = vld [vmem:[%s1] sm:$0xff]
    %v13 = vld [vmem:[%s1 + $0x8] sm:$0xff]
    %v14 = vlaneseq
    %v15 = vand.u32 %v14, 127
    %p16 = scmp.eq.s32.totalorder 0, 0
    // Predicated region
    $region10: #{cluster_loss.1} parent=1 // pred_check
      %p17 = pneg %p16
    $region11: #{cluster_loss.1} parent=1 // pred_check_branch
      %19 = sbr.rel (%p17) target = $region13
    $region12: #{cluster_loss.1} parent=1 // pred_region
      %vm20 = vcmask 0
      %21 = vst.msk [vmem:[#allocation3] sm:$0x1] %vm20, 0.0
      %v22 = vmul.f32 %v12, %v12
      %v23 = vmul.f32 %v13, %v13
      %v24 = vadd.f32 %v22, %v23
      %v25 = vrot.slane %v24, 4
      %v26 = vadd.f32 %v24, %v25
      %v27 = vrot.slane %v26, 2
      %v28 = vadd.f32 %v26, %v27
      %v29 = vrot.slane %v28, 1
      %v30 = vadd.f32 %v28, %v29
      %v31 = vmax.f32 %v30, 1e-16
      %v32 = vrsqrt.pop %v31
      %33 = vst [vmem:[#allocation2] sm:$0x1] %v32
    $region13: #{cluster_loss.1} parent=1 // pred_fallthru
      _
    %v34 = vld [vmem:[#allocation2] sm:$0x1]
    %v35 = vld [vmem:[%s0] sm:$0xff]
    %v36 = vld [vmem:[%s0 + $0x8] sm:$0xff]
    %v37 = vmul.f32 %v35, %v35
    %v38 = vmul.f32 %v36, %v36
    %v39 = vadd.f32 %v37, %v38
    %v40 = vrot.slane %v39, 4
    %v41 = vadd.f32 %v39, %v40
    %v42 = vrot.slane %v41, 2
    %v43 = vadd.f32 %v41, %v42
    %v44 = vrot.slane %v43, 1
    %v45 = vadd.f32 %v43, %v44
    %v46 = vmax.f32 %v45, 1e-16
    %v47 = vrsqrt.pop %v46
    %v48 = vmul.f32 %v47, 2.0
    %v49 = vmul.f32 %v35, %v48
    %v50 = vmul.f32 %v36, %v48
    %51 = vxpose.xlu0.b32.start [1/16] %v49, 128
    %52 = vxpose.xlu0.b32.cont [2/16] %v50, 128
    %53 = vxpose.xlu0.b32.cont [3/16] 0.0, 128
    %54 = vxpose.xlu0.b32.cont [4/16] 0.0, 128
    %55 = vxpose.xlu0.b32.cont [5/16] 0.0, 128
    %56 = vxpose.xlu0.b32.cont [6/16] 0.0, 128
    %57 = vxpose.xlu0.b32.cont [7/16] 0.0, 128
    %58 = vxpose.xlu0.b32.cont [8/16] 0.0, 128
    %59 = vxpose.xlu0.b32.cont [9/16] 0.0, 128
    %60 = vxpose.xlu0.b32.cont [10/16] 0.0, 128
    %61 = vxpose.xlu0.b32.cont [11/16] 0.0, 128
    %62 = vxpose.xlu0.b32.cont [12/16] 0.0, 128
    %63 = vxpose.xlu0.b32.cont [13/16] 0.0, 128
    %64 = vxpose.xlu0.b32.cont [14/16] 0.0, 128
    %65 = vxpose.xlu0.b32.cont [15/16] 0.0, 128
    %66 = vxpose.xlu0.b32.end [16/16] 0.0, 128
    %v67 = vpop.trf.xlu0
    %v68 = vpop.trf.xlu0
    %v69 = vpop.trf.xlu0
    %v70 = vpop.trf.xlu0
    %v71 = vpop.trf.xlu0
    %v72 = vpop.trf.xlu0
    %v73 = vpop.trf.xlu0
    %v74 = vpop.trf.xlu0
    %v75 = vpop.trf.xlu0
    %v76 = vpop.trf.xlu0
    %v77 = vpop.trf.xlu0
    %v78 = vpop.trf.xlu0
    %v79 = vpop.trf.xlu0
    %v80 = vpop.trf.xlu0
    %v81 = vpop.trf.xlu0
    %v82 = vpop.trf.xlu0
    %vm83 = vcmask 130048
    %v85 = vsel %vm83, %v67, 0
    %v88 = vsel %vm83, %v68, 0
    %v91 = vsel %vm83, %v69, 0
    %v94 = vsel %vm83, %v70, 0
    %v97 = vsel %vm83, %v71, 0
    %v100 = vsel %vm83, %v72, 0
    %v103 = vsel %vm83, %v73, 0
    %v106 = vsel %vm83, %v74, 0
    %v109 = vsel %vm83, %v75, 0
    %v112 = vsel %vm83, %v76, 0
    %v115 = vsel %vm83, %v77, 0
    %v118 = vsel %vm83, %v78, 0
    %v121 = vsel %vm83, %v79, 0
    %v124 = vsel %vm83, %v80, 0
    %v127 = vsel %vm83, %v81, 0
    %v130 = vsel %vm83, %v82, 0
    %132 = vmatprep.subr.mxu0 0.0
    %133 = vmatpush1.msra.mxu0 %v12
    %134 = vmatprep.subr.mxu0 0.0
    %135 = vmatpush1.msra.mxu0 %v13
    %136 = vmatprep.subr.mxu0 0.0
    %137 = vmatpush1.msra.mxu0 0.0
    %138 = vmatprep.subr.mxu0 0.0
    %139 = vmatpush1.msra.mxu0 0.0
    %140 = vmatprep.subr.mxu0 0.0
    %141 = vmatpush1.msra.mxu0 0.0
    %142 = vmatprep.subr.mxu0 0.0
    %143 = vmatpush1.msra.mxu0 0.0
    %144 = vmatprep.subr.mxu0 0.0
    %145 = vmatpush1.msra.mxu0 0.0
    %146 = vmatprep.subr.mxu0 0.0
    %147 = vmatpush1.msra.mxu0 0.0
    %148 = vmatprep.subr.mxu0 0.0
    %149 = vmatpush1.msra.mxu0 0.0
    %150 = vmatprep.subr.mxu0 0.0
    %151 = vmatpush1.msra.mxu0 0.0
    %152 = vmatprep.subr.mxu0 0.0
    %153 = vmatpush1.msra.mxu0 0.0
    %154 = vmatprep.subr.mxu0 0.0
    %155 = vmatpush1.msra.mxu0 0.0
    %156 = vmatprep.subr.mxu0 0.0
    %157 = vmatpush1.msra.mxu0 0.0
    %158 = vmatprep.subr.mxu0 0.0
    %159 = vmatpush1.msra.mxu0 0.0
    %160 = vmatprep.subr.mxu0 0.0
    %161 = vmatpush1.msra.mxu0 0.0
    %162 = vmatprep.subr.mxu0 0.0
    %163 = vmatpush1.msra.mxu0 0.0
    %164 = vmatprep.subr.mxu0 0.0
    %165 = vmatpush1.msra.mxu0 0.0
    %166 = vmatprep.subr.mxu0 0.0
    %167 = vmatpush1.msra.mxu0 0.0
    %168 = vmatprep.subr.mxu0 0.0
    %169 = vmatpush1.msra.mxu0 0.0
    %170 = vmatprep.subr.mxu0 0.0
    %171 = vmatpush1.msra.mxu0 0.0
    %172 = vmatprep.subr.mxu0 0.0
    %173 = vmatpush1.msra.mxu0 0.0
    %174 = vmatprep.subr.mxu0 0.0
    %175 = vmatpush1.msra.mxu0 0.0
    %176 = vmatprep.subr.mxu0 0.0
    %177 = vmatpush1.msra.mxu0 0.0
    %178 = vmatprep.subr.mxu0 0.0
    %179 = vmatpush1.msra.mxu0 0.0
    %180 = vmatprep.subr.mxu0 0.0
    %181 = vmatpush1.msra.mxu0 0.0
    %182 = vmatprep.subr.mxu0 0.0
    %183 = vmatpush1.msra.mxu0 0.0
    %184 = vmatprep.subr.mxu0 0.0
    %185 = vmatpush1.msra.mxu0 0.0
    %186 = vmatprep.subr.mxu0 0.0
    %187 = vmatpush1.msra.mxu0 0.0
    %188 = vmatprep.subr.mxu0 0.0
    %189 = vmatpush1.msra.mxu0 0.0
    %190 = vmatprep.subr.mxu0 0.0
    %191 = vmatpush1.msra.mxu0 0.0
    %192 = vmatprep.subr.mxu0 0.0
    %193 = vmatpush1.msra.mxu0 0.0
    %194 = vmatprep.subr.mxu0 0.0
    %195 = vmatpush1.msra.mxu0 0.0
    %196 = vmatprep.mubr.f32.mxu0 0.0
    %197 = vmatmul.mubr.f32.gmra.mrb[0].mxu0 %v85
    %v198 = vpop.f32.mrb[0].mxu0
    %v199 = vadd.f32 0.0, %v198
    %v200 = vpop.f32.mrb[0].mxu0
    %201 = vmatprep.mubr.f32.mxu0 0.0
    %202 = vmatmul.mubr.f32.gmra.mrb[0].mxu0 %v88
    %v203 = vpop.f32.mrb[0].mxu0
    %v204 = vadd.f32 0.0, %v203
    %v205 = vpop.f32.mrb[0].mxu0
    %206 = vmatprep.mubr.f32.mxu0 0.0
    %207 = vmatmul.mubr.f32.gmra.mrb[0].mxu0 %v91
    %v208 = vpop.f32.mrb[0].mxu0
    %v209 = vadd.f32 0.0, %v208
    %v210 = vpop.f32.mrb[0].mxu0
    %211 = vmatprep.mubr.f32.mxu0 0.0
    %212 = vmatmul.mubr.f32.gmra.mrb[0].mxu0 %v94
    %v213 = vpop.f32.mrb[0].mxu0
    %v214 = vadd.f32 0.0, %v213
    %v215 = vpop.f32.mrb[0].mxu0
    %216 = vmatprep.mubr.f32.mxu0 0.0
    %217 = vmatmul.mubr.f32.gmra.mrb[0].mxu0 %v97
    %v218 = vpop.f32.mrb[0].mxu0
    %v219 = vadd.f32 0.0, %v218
    %v220 = vpop.f32.mrb[0].mxu0
    %221 = vmatprep.mubr.f32.mxu0 0.0
    %222 = vmatmul.mubr.f32.gmra.mrb[0].mxu0 %v100
    %v223 = vpop.f32.mrb[0].mxu0
    %v224 = vadd.f32 0.0, %v223
    %v225 = vpop.f32.mrb[0].mxu0
    %226 = vmatprep.mubr.f32.mxu0 0.0
    %227 = vmatmul.mubr.f32.gmra.mrb[0].mxu0 %v103
    %v228 = vpop.f32.mrb[0].mxu0
    %v229 = vadd.f32 0.0, %v228
    %v230 = vpop.f32.mrb[0].mxu0
    %231 = vmatprep.mubr.f32.mxu0 0.0
    %232 = vmatmul.mubr.f32.gmra.mrb[0].mxu0 %v106
    %v233 = vpop.f32.mrb[0].mxu0
    %v234 = vadd.f32 0.0, %v233
    %v235 = vpop.f32.mrb[0].mxu0
    %236 = vmatprep.mubr.f32.mxu0 0.0
    %237 = vmatmul.mubr.f32.gmra.mrb[0].mxu0 %v109
    %v238 = vpop.f32.mrb[0].mxu0
    %v239 = vadd.f32 0.0, %v238
    %v240 = vpop.f32.mrb[0].mxu0
    %241 = vmatprep.mubr.f32.mxu0 0.0
    %242 = vmatmul.mubr.f32.gmra.mrb[0].mxu0 %v112
    %v243 = vpop.f32.mrb[0].mxu0
    %v244 = vadd.f32 0.0, %v243
    %v245 = vpop.f32.mrb[0].mxu0
    %246 = vmatprep.mubr.f32.mxu0 0.0
    %247 = vmatmul.mubr.f32.gmra.mrb[0].mxu0 %v115
    %v248 = vpop.f32.mrb[0].mxu0
    %v249 = vadd.f32 0.0, %v248
    %v250 = vpop.f32.mrb[0].mxu0
    %251 = vmatprep.mubr.f32.mxu0 0.0
    %252 = vmatmul.mubr.f32.gmra.mrb[0].mxu0 %v118
    %v253 = vpop.f32.mrb[0].mxu0
    %v254 = vadd.f32 0.0, %v253
    %v255 = vpop.f32.mrb[0].mxu0
    %256 = vmatprep.mubr.f32.mxu0 0.0
    %257 = vmatmul.mubr.f32.gmra.mrb[0].mxu0 %v121
    %v258 = vpop.f32.mrb[0].mxu0
    %v259 = vadd.f32 0.0, %v258
    %v260 = vpop.f32.mrb[0].mxu0
    %261 = vmatprep.mubr.f32.mxu0 0.0
    %262 = vmatmul.mubr.f32.gmra.mrb[0].mxu0 %v124
    %v263 = vpop.f32.mrb[0].mxu0
    %v264 = vadd.f32 0.0, %v263
    %v265 = vpop.f32.mrb[0].mxu0
    %266 = vmatprep.mubr.f32.mxu0 0.0
    %267 = vmatmul.mubr.f32.gmra.mrb[0].mxu0 %v127
    %v268 = vpop.f32.mrb[0].mxu0
    %v269 = vadd.f32 0.0, %v268
    %v270 = vpop.f32.mrb[0].mxu0
    %271 = vmatprep.mubr.f32.mxu0 0.0
    %272 = vmatmul.mubr.f32.gmra.mrb[0].mxu0 %v130
    %v273 = vpop.f32.mrb[0].mxu0
    %v274 = vadd.f32 0.0, %v273
    %v275 = vpop.f32.mrb[0].mxu0
    %276 = vdwg.mxu0
    %v278 = vlaneseq
    %v279 = vshrl.u32 %v278, 7
    %v280 = vsub.s32 0, %v279
    %v281 = vrot.slane %v34, %v280
    %v283 = vmul.f32 %v199, %v281
    %v284 = vmul.f32 %v204, %v281
    %v285 = vmul.f32 %v209, %v281
    %v286 = vmul.f32 %v214, %v281
    %v287 = vmul.f32 %v219, %v281
    %v288 = vmul.f32 %v224, %v281
    %v289 = vmul.f32 %v229, %v281
    %v290 = vmul.f32 %v234, %v281
    %v291 = vmul.f32 %v239, %v281
    %v292 = vmul.f32 %v244, %v281
    %v293 = vmul.f32 %v249, %v281
    %v294 = vmul.f32 %v254, %v281
    %v295 = vmul.f32 %v259, %v281
    %v296 = vmul.f32 %v264, %v281
    %v297 = vmul.f32 %v269, %v281
    %v298 = vmul.f32 %v274, %v281
    %v299 = vlaneseq
    %v300 = vshrl.u32 %v299, 7
    %v301 = vadd.s32 %v300, 8
    %v302 = vadd.s32 %v300, 16
    %v303 = vadd.s32 %v300, 24
    %v304 = vadd.s32 %v300, 32
    %v305 = vadd.s32 %v300, 40
    %v306 = vadd.s32 %v300, 48
    %v307 = vadd.s32 %v300, 56
    %v308 = vadd.s32 %v300, 64
    %v309 = vadd.s32 %v300, 72
    %v310 = vadd.s32 %v300, 80
    %v311 = vadd.s32 %v300, 88
    %v312 = vadd.s32 %v300, 96
    %v313 = vadd.s32 %v300, 104
    %v314 = vadd.s32 %v300, 112
    %v315 = vadd.s32 %v300, 120
    %s316 = smul.u32 0, 128
    %v317 = vstv %s316
    %v318 = vadd.s32 %v300, %v317
    %v319 = vadd.s32 %v301, %v317
    %v320 = vadd.s32 %v302, %v317
    %v321 = vadd.s32 %v303, %v317
    %v322 = vadd.s32 %v304, %v317
    %v323 = vadd.s32 %v305, %v317
    %v324 = vadd.s32 %v306, %v317
    %v325 = vadd.s32 %v307, %v317
    %v326 = vadd.s32 %v308, %v317
    %v327 = vadd.s32 %v309, %v317
    %v328 = vadd.s32 %v310, %v317
    %v329 = vadd.s32 %v311, %v317
    %v330 = vadd.s32 %v312, %v317
    %v331 = vadd.s32 %v313, %v317
    %v332 = vadd.s32 %v314, %v317
    %v333 = vadd.s32 %v315, %v317
    %vm334 = vcmp.eq.s32.totalorder %v15, %v318
    %vm335 = vcmp.eq.s32.totalorder %v15, %v319
    %vm336 = vcmp.eq.s32.totalorder %v15, %v320
    %vm337 = vcmp.eq.s32.totalorder %v15, %v321
    %vm338 = vcmp.eq.s32.totalorder %v15, %v322
    %vm339 = vcmp.eq.s32.totalorder %v15, %v323
    %vm340 = vcmp.eq.s32.totalorder %v15, %v324
    %vm341 = vcmp.eq.s32.totalorder %v15, %v325
    %vm342 = vcmp.eq.s32.totalorder %v15, %v326
    %vm343 = vcmp.eq.s32.totalorder %v15, %v327
    %vm344 = vcmp.eq.s32.totalorder %v15, %v328
    %vm345 = vcmp.eq.s32.totalorder %v15, %v329
    %vm346 = vcmp.eq.s32.totalorder %v15, %v330
    %vm347 = vcmp.eq.s32.totalorder %v15, %v331
    %vm348 = vcmp.eq.s32.totalorder %v15, %v332
    %vm349 = vcmp.eq.s32.totalorder %v15, %v333
    %vm350 = vcmp.ge.s32.totalorder %v15, 16
    %v351 = vsel %vm350, 1, 0
    %vm352 = vcmp.eq.s32.totalorder %v351, 1
    %vm353 = vmor %vm334, %vm352
    %vm354 = vmor %vm335, %vm352
    %vm355 = vmor %vm336, %vm352
    %vm356 = vmor %vm337, %vm352
    %vm357 = vmor %vm338, %vm352
    %vm358 = vmor %vm339, %vm352
    %vm359 = vmor %vm340, %vm352
    %vm360 = vmor %vm341, %vm352
    %vm361 = vmor %vm342, %vm352
    %vm362 = vmor %vm343, %vm352
    %vm363 = vmor %vm344, %vm352
    %vm364 = vmor %vm345, %vm352
    %vm365 = vmor %vm346, %vm352
    %vm366 = vmor %vm347, %vm352
    %vm367 = vmor %vm348, %vm352
    %vm368 = vmor %vm349, %vm352
    %v369 = vsel %vm353, -1e+30, %v283
    %v370 = vsel %vm354, -1e+30, %v284
    %v371 = vsel %vm355, -1e+30, %v285
    %v372 = vsel %vm356, -1e+30, %v286
    %v373 = vsel %vm357, -1e+30, %v287
    %v374 = vsel %vm358, -1e+30, %v288
    %v375 = vsel %vm359, -1e+30, %v289
    %v376 = vsel %vm360, -1e+30, %v290
    %v377 = vsel %vm361, -1e+30, %v291
    %v378 = vsel %vm362, -1e+30, %v292
    %v379 = vsel %vm363, -1e+30, %v293
    %v380 = vsel %vm364, -1e+30, %v294
    %v381 = vsel %vm365, -1e+30, %v295
    %v382 = vsel %vm366, -1e+30, %v296
    %v383 = vsel %vm367, -1e+30, %v297
    %v384 = vsel %vm368, -1e+30, %v298
    %385 = vmax.xlane.f32.xlu0 %v369
    %v386 = vpop.xlane.xlu0 %385
    %387 = vmax.xlane.f32.xlu0 %v370
    %v388 = vpop.xlane.xlu0 %387
    %389 = vmax.xlane.f32.xlu0 %v371
    %v390 = vpop.xlane.xlu0 %389
    %391 = vmax.xlane.f32.xlu0 %v372
    %v392 = vpop.xlane.xlu0 %391
    %393 = vmax.xlane.f32.xlu0 %v373
    %v394 = vpop.xlane.xlu0 %393
    %395 = vmax.xlane.f32.xlu0 %v374
    %v396 = vpop.xlane.xlu0 %395
    %397 = vmax.xlane.f32.xlu0 %v375
    %v398 = vpop.xlane.xlu0 %397
    %399 = vmax.xlane.f32.xlu0 %v376
    %v400 = vpop.xlane.xlu0 %399
    %401 = vmax.xlane.f32.xlu0 %v377
    %v402 = vpop.xlane.xlu0 %401
    %403 = vmax.xlane.f32.xlu0 %v378
    %v404 = vpop.xlane.xlu0 %403
    %405 = vmax.xlane.f32.xlu0 %v379
    %v406 = vpop.xlane.xlu0 %405
    %407 = vmax.xlane.f32.xlu0 %v380
    %v408 = vpop.xlane.xlu0 %407
    %409 = vmax.xlane.f32.xlu0 %v381
    %v410 = vpop.xlane.xlu0 %409
    %411 = vmax.xlane.f32.xlu0 %v382
    %v412 = vpop.xlane.xlu0 %411
    %413 = vmax.xlane.f32.xlu0 %v383
    %v414 = vpop.xlane.xlu0 %413
    %415 = vmax.xlane.f32.xlu0 %v384
    %v416 = vpop.xlane.xlu0 %415
    %v417 = vsub.f32 %v369, %v386
    %v418 = vsub.f32 %v370, %v388
    %v419 = vsub.f32 %v371, %v390
    %v420 = vsub.f32 %v372, %v392
    %v421 = vsub.f32 %v373, %v394
    %v422 = vsub.f32 %v374, %v396
    %v423 = vsub.f32 %v375, %v398
    %v424 = vsub.f32 %v376, %v400
    %v425 = vsub.f32 %v377, %v402
    %v426 = vsub.f32 %v378, %v404
    %v427 = vsub.f32 %v379, %v406
    %v428 = vsub.f32 %v380, %v408
    %v429 = vsub.f32 %v381, %v410
    %v430 = vsub.f32 %v382, %v412
    %v431 = vsub.f32 %v383, %v414
    %v432 = vsub.f32 %v384, %v416
    %v433 = vmul.f32 %v417, 1.442695
    %v434 = vpow.pop %v433
    %v435 = vmul.f32 %v418, 1.442695
    %v436 = vpow.pop %v435
    %v437 = vmul.f32 %v419, 1.442695
    %v438 = vpow.pop %v437
    %v439 = vmul.f32 %v420, 1.442695
    %v440 = vpow.pop %v439
    %v441 = vmul.f32 %v421, 1.442695
    %v442 = vpow.pop %v441
    %v443 = vmul.f32 %v422, 1.442695
    %v444 = vpow.pop %v443
    %v445 = vmul.f32 %v423, 1.442695
    %v446 = vpow.pop %v445
    %v447 = vmul.f32 %v424, 1.442695
    %v448 = vpow.pop %v447
    %v449 = vmul.f32 %v425, 1.442695
    %v450 = vpow.pop %v449
    %v451 = vmul.f32 %v426, 1.442695
    %v452 = vpow.pop %v451
    %v453 = vmul.f32 %v427, 1.442695
    %v454 = vpow.pop %v453
    %v455 = vmul.f32 %v428, 1.442695
    %v456 = vpow.pop %v455
    %v457 = vmul.f32 %v429, 1.442695
    %v458 = vpow.pop %v457
    %v459 = vmul.f32 %v430, 1.442695
    %v460 = vpow.pop %v459
    %v461 = vmul.f32 %v431, 1.442695
    %v462 = vpow.pop %v461
    %v463 = vmul.f32 %v432, 1.442695
    %v464 = vpow.pop %v463
    %465 = vadd.xlane.f32.xlu0 %v434
    %v466 = vpop.xlane.xlu0 %465
    %467 = vadd.xlane.f32.xlu0 %v436
    %v468 = vpop.xlane.xlu0 %467
    %469 = vadd.xlane.f32.xlu0 %v438
    %v470 = vpop.xlane.xlu0 %469
    %471 = vadd.xlane.f32.xlu0 %v440
    %v472 = vpop.xlane.xlu0 %471
    %473 = vadd.xlane.f32.xlu0 %v442
    %v474 = vpop.xlane.xlu0 %473
    %475 = vadd.xlane.f32.xlu0 %v444
    %v476 = vpop.xlane.xlu0 %475
    %477 = vadd.xlane.f32.xlu0 %v446
    %v478 = vpop.xlane.xlu0 %477
    %479 = vadd.xlane.f32.xlu0 %v448
    %v480 = vpop.xlane.xlu0 %479
    %481 = vadd.xlane.f32.xlu0 %v450
    %v482 = vpop.xlane.xlu0 %481
    %483 = vadd.xlane.f32.xlu0 %v452
    %v484 = vpop.xlane.xlu0 %483
    %485 = vadd.xlane.f32.xlu0 %v454
    %v486 = vpop.xlane.xlu0 %485
    %487 = vadd.xlane.f32.xlu0 %v456
    %v488 = vpop.xlane.xlu0 %487
    %489 = vadd.xlane.f32.xlu0 %v458
    %v490 = vpop.xlane.xlu0 %489
    %491 = vadd.xlane.f32.xlu0 %v460
    %v492 = vpop.xlane.xlu0 %491
    %493 = vadd.xlane.f32.xlu0 %v462
    %v494 = vpop.xlane.xlu0 %493
    %495 = vadd.xlane.f32.xlu0 %v464
    %v496 = vpop.xlane.xlu0 %495
    %v497 = vlog2.pop %v466
    %v498 = vmul.f32 %v497, 0.6931472
    %v499 = vlog2.pop %v468
    %v500 = vmul.f32 %v499, 0.6931472
    %v501 = vlog2.pop %v470
    %v502 = vmul.f32 %v501, 0.6931472
    %v503 = vlog2.pop %v472
    %v504 = vmul.f32 %v503, 0.6931472
    %v505 = vlog2.pop %v474
    %v506 = vmul.f32 %v505, 0.6931472
    %v507 = vlog2.pop %v476
    %v508 = vmul.f32 %v507, 0.6931472
    %v509 = vlog2.pop %v478
    %v510 = vmul.f32 %v509, 0.6931472
    %v511 = vlog2.pop %v480
    %v512 = vmul.f32 %v511, 0.6931472
    %v513 = vlog2.pop %v482
    %v514 = vmul.f32 %v513, 0.6931472
    %v515 = vlog2.pop %v484
    %v516 = vmul.f32 %v515, 0.6931472
    %v517 = vlog2.pop %v486
    %v518 = vmul.f32 %v517, 0.6931472
    %v519 = vlog2.pop %v488
    %v520 = vmul.f32 %v519, 0.6931472
    %v521 = vlog2.pop %v490
    %v522 = vmul.f32 %v521, 0.6931472
    %v523 = vlog2.pop %v492
    %v524 = vmul.f32 %v523, 0.6931472
    %v525 = vlog2.pop %v494
    %v526 = vmul.f32 %v525, 0.6931472
    %v527 = vlog2.pop %v496
    %v528 = vmul.f32 %v527, 0.6931472
    %v529 = vadd.f32 %v386, %v498
    %v530 = vadd.f32 %v388, %v500
    %v531 = vadd.f32 %v390, %v502
    %v532 = vadd.f32 %v392, %v504
    %v533 = vadd.f32 %v394, %v506
    %v534 = vadd.f32 %v396, %v508
    %v535 = vadd.f32 %v398, %v510
    %v536 = vadd.f32 %v400, %v512
    %v537 = vadd.f32 %v402, %v514
    %v538 = vadd.f32 %v404, %v516
    %v539 = vadd.f32 %v406, %v518
    %v540 = vadd.f32 %v408, %v520
    %v541 = vadd.f32 %v410, %v522
    %v542 = vadd.f32 %v412, %v524
    %v543 = vadd.f32 %v414, %v526
    %v544 = vadd.f32 %v416, %v528
    %v545 = vld [vmem:[#allocation3] sm:$0x1]
    %vm546 = vcmp.lt.s32.totalorder %v318, 16
    %vm547 = vcmp.lt.s32.totalorder %v319, 16
    %vm548 = vcmp.lt.s32.totalorder %v320, 16
    %vm549 = vcmp.lt.s32.totalorder %v321, 16
    %vm550 = vcmp.lt.s32.totalorder %v322, 16
    %vm551 = vcmp.lt.s32.totalorder %v323, 16
    %vm552 = vcmp.lt.s32.totalorder %v324, 16
    %vm553 = vcmp.lt.s32.totalorder %v325, 16
    %vm554 = vcmp.lt.s32.totalorder %v326, 16
    %vm555 = vcmp.lt.s32.totalorder %v327, 16
    %vm556 = vcmp.lt.s32.totalorder %v328, 16
    %vm557 = vcmp.lt.s32.totalorder %v329, 16
    %vm558 = vcmp.lt.s32.totalorder %v330, 16
    %vm559 = vcmp.lt.s32.totalorder %v331, 16
    %vm560 = vcmp.lt.s32.totalorder %v332, 16
    %vm561 = vcmp.lt.s32.totalorder %v333, 16
    %v562 = vsel %vm546, %v529, 0.0
    %v563 = vsel %vm547, %v530, 0.0
    %v564 = vsel %vm548, %v531, 0.0
    %v565 = vsel %vm549, %v532, 0.0
    %v566 = vsel %vm550, %v533, 0.0
    %v567 = vsel %vm551, %v534, 0.0
    %v568 = vsel %vm552, %v535, 0.0
    %v569 = vsel %vm553, %v536, 0.0
    %v570 = vsel %vm554, %v537, 0.0
    %v571 = vsel %vm555, %v538, 0.0
    %v572 = vsel %vm556, %v539, 0.0
    %v573 = vsel %vm557, %v540, 0.0
    %v574 = vsel %vm558, %v541, 0.0
    %v575 = vsel %vm559, %v542, 0.0
    %v576 = vsel %vm560, %v543, 0.0
    %v577 = vsel %vm561, %v544, 0.0
    %v578 = vadd.f32 %v562, %v563
    %v579 = vadd.f32 %v578, %v564
    %v580 = vadd.f32 %v579, %v565
    %v581 = vadd.f32 %v580, %v566
    %v582 = vadd.f32 %v581, %v567
    %v583 = vadd.f32 %v582, %v568
    %v584 = vadd.f32 %v583, %v569
    %v585 = vadd.f32 %v584, %v570
    %v586 = vadd.f32 %v585, %v571
    %v587 = vadd.f32 %v586, %v572
    %v588 = vadd.f32 %v587, %v573
    %v589 = vadd.f32 %v588, %v574
    %v590 = vadd.f32 %v589, %v575
    %v591 = vadd.f32 %v590, %v576
    %v592 = vadd.f32 %v591, %v577
    %v593 = vrot.slane %v592, 4
    %v594 = vadd.f32 %v592, %v593
    %v595 = vrot.slane %v594, 2
    %v596 = vadd.f32 %v594, %v595
    %v597 = vrot.slane %v596, 1
    %v598 = vadd.f32 %v596, %v597
    %v599 = vadd.f32 %v545, %v598
    %vm600 = vcmask 0
    %601 = vst.msk [vmem:[#allocation3] sm:$0x1] %vm600, %v599
    // Predicated region
    $region14: #{cluster_loss.1} parent=1 // pred_check
      %p602 = pneg %p16
    $region15: #{cluster_loss.1} parent=1 // pred_check_branch
      %604 = sbr.rel (%p602) target = $region17
    $region16: #{cluster_loss.1} parent=1 // pred_region
      %v605 = vadd.f32 %v12, %v13
      %v606 = vrot.slane %v605, 4
      %v607 = vadd.f32 %v605, %v606
      %v608 = vrot.slane %v607, 2
      %v609 = vadd.f32 %v607, %v608
      %v610 = vrot.slane %v609, 1
      %v611 = vadd.f32 %v609, %v610
      %vm612 = vcmp.lt.s32.totalorder %v15, 8
      %vm613 = vcmp.ge.s32.totalorder %v15, 8
      %vm614 = vcmp.lt.s32.totalorder %v15, 16
      %vm615 = vmand %vm613, %vm614
      %v616 = vsel %vm612, %v611, 0.0
      %617 = vadd.xlane.f32.xlu0 %v616
      %v618 = vpop.xlane.xlu0 %617
      %v619 = vsel %vm615, %v611, 0.0
      %620 = vadd.xlane.f32.xlu0 %v619
      %v621 = vpop.xlane.xlu0 %620
      %v622 = vsel %vm612, %v618, %v621
      %v623 = vrcp.pop %v622
      %v624 = vmul.f32 %v611, %v623
      %vm625 = vmor %vm612, %vm615
      %v626 = vlog2.pop %v624
      %v627 = vmul.f32 %v626, 0.6931472
      %v628 = vmul.f32 %v624, %v627
      %v629 = vsel %vm625, %v628, 0.0
      %630 = vadd.xlane.f32.xlu0 %v629
      %v631 = vpop.xlane.xlu0 %630
      %v632 = vadd.f32 %v631, 4.158883
      %635 = vrot.lane.b32.xlu0 %v12, 120
      %v636 = vpop.permute.xlu0 %635
      %637 = vrot.lane.b32.xlu0 %v13, 120
      %v638 = vpop.permute.xlu0 %637
      %v641 = vmul.f32 %v12, %v636
      %v642 = vmul.f32 %v13, %v638
      %vm643 = vcmask 64512
      %v644 = vsel %vm643, %v641, 0.0
      %v645 = vsel %vm643, %v642, 0.0
      %v646 = vadd.f32 %v644, %v645
      %v647 = vrot.slane %v646, 4
      %v648 = vadd.f32 %v646, %v647
      %v649 = vrot.slane %v648, 2
      %v650 = vadd.f32 %v648, %v649
      %v651 = vrot.slane %v650, 1
      %v652 = vadd.f32 %v650, %v651
      %v653 = vmul.f32 %v652, %v34
      %654 = vrot.lane.b32.xlu0 %v281, 120
      %v655 = vpop.permute.xlu0 %654
      %v657 = vmul.f32 %v653, %v655
      %vm658 = vcmask 57344
      %v659 = vsel %vm658, %v657, 0.0
      %660 = vadd.xlane.f32.xlu0 %v659
      %v661 = vpop.xlane.xlu0 %660
      %v662 = vmul.f32 %v661, 4.0
      %v663 = vld [vmem:[#allocation3] sm:$0x1]
      %v664 = vsub.f32 %v663, %v662
      %v665 = vmul.f32 %v664, 0.0625
      %v666 = vadd.f32 %v665, %v632
      %s667 = vtos %v666
      %s668 = scalar_lea.smem [#allocation4], 0
      %669 = sst [smem:[%s668]] %s667
    $region17: #{cluster_loss.1} parent=1 // pred_fallthru
      _
    // Predicated region
    $region18: #{cluster_loss.1} parent=1 // pred_check
      _
    $region19: #{cluster_loss.1} parent=1 // pred_check_branch
      %671 = sbr.rel (0) target = $region21
    $region20: #{cluster_loss.1} parent=1 // pred_region
      %s673 = ssub.s32 16, 16
      %674 = vsyncadd [#allocation5], %s673
      %677 = dma.smem_to_hbm [#allocation4], 16, %s2, [#allocation5]
    $region21: #{cluster_loss.1} parent=1 // pred_fallthru
      _
    // Predicated region
    $region22: #{cluster_loss.1} parent=1 // pred_check
      _
    $region23: #{cluster_loss.1} parent=1 // pred_check_branch
      %679 = sbr.rel (0) target = $region25
    $region24: #{cluster_loss.1} parent=1 // pred_region
      %680 = dma.done [#allocation5], 16
    $region25: #{cluster_loss.1} parent=1 // pred_fallthru
      _
    %681 = sfence
    %682 = vsyncpa [#allocation5], 1

</llo_original>
